<compile_context>
chip_gen: v7x
topology: tpu7x:2x2x1
jax: 0.10.0
libtpu: 0.0.40
codegen_flags: <defaults>
</compile_context>

<pallas_src>
import functools

import jax
import jax.numpy as jnp
import numpy as np
from jax.experimental import pallas as pl
from jax.experimental.pallas import tpu as pltpu


def _make_kernel(bb, T, c1, c2):
    """Kernel processing a block of `bb` examples, each of length T."""
    M = bb * T  # rows of the batched, time-major slab

    def kernel(x_ref, m_ref, p_ref, w1_ref, w2_ref, w3_ref, b_ref, o_ref):
        # x_ref : (M, Cin)     example-major, time on sublanes, channels on lanes
        # m_ref : (M, 8)       col0: 0 at t==0, col1: 0 at t==T-1,
        #                      col2: 0 at the last pooled position (else 1)
        # p_ref : (bb, M)      AdaptiveAvgPool1d(1) selection/averaging matrix
        # w1_ref: (3*Cin, c1)  conv1 taps stacked [t-1 | t | t+1]
        # w2_ref: (3*c1, c2)   conv2 taps stacked the same way
        # w3_ref: (c2, n_pad)  Linear weight, classes zero-padded to 128 lanes
        # b_ref : (3, n_pad)   row0=b1, row1=b2, row2=b3 (zero padded)
        # o_ref : (bb, n_pad)
        h = x_ref[...]
        m0 = m_ref[:, 0:1]   # zero left edge of every example
        m1 = m_ref[:, 1:2]   # zero right edge (conv1)
        m2 = m_ref[:, 2:3]   # zero right edge of the pooled sequence (conv2)

        # ---- Conv1 (k=3, padding=1) + ReLU as one fused matmul ---------------
        h_m1 = pltpu.roll(h, 1, axis=0) * m0              # h[t-1]
        h_p1 = pltpu.roll(h, M - 1, axis=0) * m1          # h[t+1]
        hcat = jnp.concatenate([h_m1, h, h_p1], axis=1)   # (M, 3*Cin)
        y1 = jnp.dot(hcat, w1_ref[...], preferred_element_type=jnp.float32)
        y1 = jnp.maximum(y1 + b_ref[0:1, 0:c1], 0.0)      # (M, c1)

        # ---- MaxPool1d(2): pooled pair j lives in place at even offset 2j ----
        g = jnp.maximum(y1, pltpu.roll(y1, M - 1, axis=0))

        # ---- Conv2 (k=3, padding=1) + ReLU on the stride-2 pooled sequence ---
        g_m1 = pltpu.roll(g, 2, axis=0) * m0               # pooled[j-1]
        g_p1 = pltpu.roll(g, M - 2, axis=0) * m2           # pooled[j+1]
        gcat = jnp.concatenate([g_m1, g, g_p1], axis=1)    # (M, 3*c1)
        y2 = jnp.dot(gcat, w2_ref[...], preferred_element_type=jnp.float32)
        y2 = jnp.maximum(y2 + b_ref[1:2, 0:c2], 0.0)       # valid at even offsets

        # ---- AdaptiveAvgPool1d(1): per-example mean as a (bb, M) matmul ------
        feat = jnp.dot(p_ref[...], y2, preferred_element_type=jnp.float32)  # (bb, c2)

        # ---- Linear (lane-dense padded store) --------------------------------
        out = jnp.dot(feat, w3_ref[...], preferred_element_type=jnp.float32)
        o_ref[...] = out + b_ref[2:3, :]

    return kernel


@functools.partial(jax.jit, static_argnames=("batch_block",))
def small_csp_cnn_forward(x_nct, w1, b1, w2, b2, w3, b3, *, batch_block=None):
    """x_nct: (B, n_components, n_times) float32, like the PyTorch module."""
    B, Cin, T = x_nct.shape
    c1 = w1.shape[0]                              # 16
    c2 = w2.shape[0]                              # 32
    n_classes = w3.shape[0]
    T2 = T // 2                                   # MaxPool1d(2) output length

    # Adaptive batch block: aim for ~512 rows per grid step to amortize the
    # fixed per-step overhead; cap so the pool matrix stays tiny.
    if batch_block is None:
        batch_block = min(64, max(8, -(-512 // T)))
    bb = min(B, batch_block)
    if bb < B:                                    # multi-step: 8-row aligned blocks
        bb = ((bb + 7) // 8) * 8
    Bp = ((B + bb - 1) // bb) * bb                # pad batch to a bb multiple
    M = bb * T
    n_pad = ((n_classes + 127) // 128) * 128      # lane-dense class dim

    f32 = jnp.float32
    x = x_nct.astype(f32)
    if Bp != B:
        x = jnp.pad(x, ((0, Bp - B), (0, 0), (0, 0)))
    # NCT -> (Bp*T, Cin): fold the batch into the matmul M dimension.
    x2d = jnp.transpose(x, (0, 2, 1)).reshape(Bp * T, Cin)

    # Fuse each conv's three taps into one stacked (3*Cin, Cout) matrix and
    # pack all biases (+ padded Linear weight) into a few lane-padded operands.
    w1cat = jnp.concatenate([w1[:, :, 0].T, w1[:, :, 1].T, w1[:, :, 2].T], 0).astype(f32)
    w2cat = jnp.concatenate([w2[:, :, 0].T, w2[:, :, 1].T, w2[:, :, 2].T], 0).astype(f32)
    w3pad = jnp.zeros((c2, n_pad), f32).at[:, :n_classes].set(w3.T.astype(f32))
    bias = jnp.zeros((3, n_pad), f32)
    bias = bias.at[0, :c1].set(b1.astype(f32))
    bias = bias.at[1, :c2].set(b2.astype(f32))
    bias = bias.at[2, :n_classes].set(b3.astype(f32))

    # Position-dependent constants (pure functions of static shapes), built
    # once at trace time -> XLA constants, DMA'd once and pipelined.
    off = np.arange(M) % T
    m_np = np.zeros((M, 8), np.float32)
    m_np[:, 0] = off != 0                 # not the left edge of an example
    m_np[:, 1] = off != T - 1             # not the conv1 right edge
    m_np[:, 2] = off != 2 * (T2 - 1)      # not the last pooled position
    pool_np = np.zeros((bb, M), np.float32)
    for e in range(bb):
        pool_np[e, e * T: e * T + 2 * T2: 2] = 1.0 / T2
    masks = jnp.asarray(m_np)
    pool = jnp.asarray(pool_np)

    out = pl.pallas_call(
        _make_kernel(bb, T, c1, c2),
        out_shape=jax.ShapeDtypeStruct((Bp, n_pad), jnp.float32),
        grid=(Bp // bb,),
        in_specs=[
            pl.BlockSpec((M, Cin), lambda i: (i, 0)),      # batch block of examples
            pl.BlockSpec((M, 8), lambda i: (0, 0)),        # edge masks (per-block const)
            pl.BlockSpec((bb, M), lambda i: (0, 0)),       # avg-pool matrix
            pl.BlockSpec(w1cat.shape, lambda i: (0, 0)),
            pl.BlockSpec(w2cat.shape, lambda i: (0, 0)),
            pl.BlockSpec(w3pad.shape, lambda i: (0, 0)),
            pl.BlockSpec(bias.shape, lambda i: (0, 0)),
        ],
        out_specs=pl.BlockSpec((bb, n_pad), lambda i: (i, 0)),
        compiler_params=pltpu.CompilerParams(dimension_semantics=("parallel",)),
    )(x2d, masks, pool, w1cat, w2cat, w3pad, bias)

    return out[:B, :n_classes]


def reference_forward(x, w1, b1, w2, b2, w3, b3):
    """Plain-JAX reference matching torch semantics (NCT layout)."""
    dn = ("NCH", "OIH", "NCH")
    y = jax.lax.conv_general_dilated(x, w1, window_strides=(1,),
                                     padding=((1, 1),), dimension_numbers=dn)
    y = jax.nn.relu(y + b1[None, :, None])
    B, C, T = y.shape
    y = y[:, :, :(T // 2) * 2].reshape(B, C, T // 2, 2).max(-1)
    y = jax.lax.conv_general_dilated(y, w2, window_strides=(1,),
                                     padding=((1, 1),), dimension_numbers=dn)
    y = jax.nn.relu(y + b2[None, :, None])
    feat = y.mean(-1)                                     # AdaptiveAvgPool1d(1)+Flatten
    return feat @ w3.T + b3


def _uniform(key, shape, fan_in):
    bound = 1.0 / np.sqrt(fan_in)
    return jax.random.uniform(key, shape, jnp.float32, -bound, bound)


if __name__ == "__main__":
    # Small shapes consistent with the module's forward.
    B, n_components, n_times, n_classes = 2, 4, 16, 3

    key = jax.random.PRNGKey(0)
    kx, k1w, k1b, k2w, k2b, k3w, k3b = jax.random.split(key, 7)

    # Deterministic, PyTorch-default-style uniform init (bound = 1/sqrt(fan_in)).
    w1 = _uniform(k1w, (16, n_components, 3), n_components * 3)
    b1 = _uniform(k1b, (16,), n_components * 3)
    w2 = _uniform(k2w, (32, 16, 3), 16 * 3)
    b2 = _uniform(k2b, (32,), 16 * 3)
    w3 = _uniform(k3w, (n_classes, 32), 32)
    b3 = _uniform(k3b, (n_classes,), 32)

    x = jax.random.normal(kx, (B, n_components, n_times), jnp.float32)

    out = small_csp_cnn_forward(x, w1, b1, w2, b2, w3, b3)
    out = jax.block_until_ready(out)

    ref = reference_forward(x, w1, b1, w2, b2, w3, b3)
    np.testing.assert_allclose(np.asarray(out), np.asarray(ref), rtol=1e-4, atol=1e-5)

    print("KERNEL_OK")
</pallas_src>

<mosaic_0001>
module attributes {stable_mosaic.version = 11 : i64} {
  func.func @kernel(%arg0: i32, %arg1: memref<32x4xf32, #tpu.memory_space<vmem>>, %arg2: memref<32x8xf32, #tpu.memory_space<vmem>>, %arg3: memref<2x32xf32, #tpu.memory_space<vmem>>, %arg4: memref<12x16xf32, #tpu.memory_space<vmem>>, %arg5: memref<48x32xf32, #tpu.memory_space<vmem>>, %arg6: memref<32x128xf32, #tpu.memory_space<vmem>>, %arg7: memref<3x128xf32, #tpu.memory_space<vmem>>, %arg8: memref<2x128xf32, #tpu.memory_space<vmem>>) attributes {dimension_semantics = [#tpu.dimension_semantics<parallel>], iteration_bounds = array<i64: 1>, scalar_prefetch = 0 : i64, scratch_operands = 0 : i64, tpu.core_type = #tpu.core_type<tc>, window_params = [{transform_indices = @transform_0, window_bounds = array<i64: 32, 4>}, {pipeline_mode = #tpu.pipeline_mode<synchronous>, transform_indices = @transform_1, window_bounds = array<i64: 32, 8>}, {pipeline_mode = #tpu.pipeline_mode<synchronous>, transform_indices = @transform_2, window_bounds = array<i64: 2, 32>}, {pipeline_mode = #tpu.pipeline_mode<synchronous>, transform_indices = @transform_3, window_bounds = array<i64: 12, 16>}, {pipeline_mode = #tpu.pipeline_mode<synchronous>, transform_indices = @transform_4, window_bounds = array<i64: 48, 32>}, {pipeline_mode = #tpu.pipeline_mode<synchronous>, transform_indices = @transform_5, window_bounds = array<i64: 32, 128>}, {pipeline_mode = #tpu.pipeline_mode<synchronous>, transform_indices = @transform_6, window_bounds = array<i64: 3, 128>}, {transform_indices = @transform_7, window_bounds = array<i64: 2, 128>}]} {
    %c0 = arith.constant 0 : index
    %c0_0 = arith.constant 0 : index
    %0 = vector.load %arg1[%c0, %c0_0] : memref<32x4xf32, #tpu.memory_space<vmem>>, vector<32x4xf32>
    %c0_1 = arith.constant 0 : index
    %c0_2 = arith.constant 0 : index
    %1 = vector.load %arg2[%c0_1, %c0_2] : memref<32x8xf32, #tpu.memory_space<vmem>>, vector<32x1xf32>
    %c0_3 = arith.constant 0 : index
    %c1 = arith.constant 1 : index
    %2 = vector.load %arg2[%c0_3, %c1] : memref<32x8xf32, #tpu.memory_space<vmem>>, vector<32x1xf32>
    %c0_4 = arith.constant 0 : index
    %c2 = arith.constant 2 : index
    %3 = vector.load %arg2[%c0_4, %c2] : memref<32x8xf32, #tpu.memory_space<vmem>>, vector<32x1xf32>
    %c1_i32 = arith.constant 1 : i32
    %4 = tpu.dynamic_rotate %0 by %c1_i32 dim 0 : vector<32x4xf32>, i32 -> vector<32x4xf32>
    %5 = vector.broadcast %1 : vector<32x1xf32> to vector<32x4xf32>
    %6 = arith.mulf %4, %5 : vector<32x4xf32>
    %c31_i32 = arith.constant 31 : i32
    %7 = tpu.dynamic_rotate %0 by %c31_i32 dim 0 : vector<32x4xf32>, i32 -> vector<32x4xf32>
    %8 = vector.broadcast %2 : vector<32x1xf32> to vector<32x4xf32>
    %9 = arith.mulf %7, %8 : vector<32x4xf32>
    %10 = tpu.concatenate %6, %0, %9 in 1 : vector<32x4xf32>, vector<32x4xf32>, vector<32x4xf32> -> vector<32x12xf32>
    %c0_5 = arith.constant 0 : index
    %c0_6 = arith.constant 0 : index
    %11 = vector.load %arg4[%c0_5, %c0_6] : memref<12x16xf32, #tpu.memory_space<vmem>>, vector<12x16xf32>
    %cst = arith.constant dense<0.000000e+00> : vector<32x16xf32>
    %12 = tpu.matmul %10, %11, %cst {dimension_numbers = #tpu.dot_dimension_numbers<[1], [0], [0], [1], [0, 0, 1, 1], [], []>} : vector<32x12xf32>, vector<12x16xf32>, vector<32x16xf32> -> vector<32x16xf32>
    %c0_7 = arith.constant 0 : index
    %c0_8 = arith.constant 0 : index
    %13 = vector.load %arg7[%c0_7, %c0_8] : memref<3x128xf32, #tpu.memory_space<vmem>>, vector<1x16xf32>
    %14 = vector.broadcast %13 : vector<1x16xf32> to vector<32x16xf32>
    %15 = arith.addf %12, %14 : vector<32x16xf32>
    %cst_9 = arith.constant 0.000000e+00 : f32
    %16 = vector.broadcast %cst_9 : f32 to vector<32x16xf32>
    %17 = arith.maximumf %15, %16 : vector<32x16xf32>
    %c31_i32_10 = arith.constant 31 : i32
    %18 = tpu.dynamic_rotate %17 by %c31_i32_10 dim 0 : vector<32x16xf32>, i32 -> vector<32x16xf32>
    %19 = arith.maximumf %17, %18 : vector<32x16xf32>
    %c2_i32 = arith.constant 2 : i32
    %20 = tpu.dynamic_rotate %19 by %c2_i32 dim 0 : vector<32x16xf32>, i32 -> vector<32x16xf32>
    %21 = vector.broadcast %1 : vector<32x1xf32> to vector<32x16xf32>
    %22 = arith.mulf %20, %21 : vector<32x16xf32>
    %c30_i32 = arith.constant 30 : i32
    %23 = tpu.dynamic_rotate %19 by %c30_i32 dim 0 : vector<32x16xf32>, i32 -> vector<32x16xf32>
    %24 = vector.broadcast %3 : vector<32x1xf32> to vector<32x16xf32>
    %25 = arith.mulf %23, %24 : vector<32x16xf32>
    %26 = tpu.concatenate %22, %19, %25 in 1 : vector<32x16xf32>, vector<32x16xf32>, vector<32x16xf32> -> vector<32x48xf32>
    %c0_11 = arith.constant 0 : index
    %c0_12 = arith.constant 0 : index
    %27 = vector.load %arg5[%c0_11, %c0_12] : memref<48x32xf32, #tpu.memory_space<vmem>>, vector<48x32xf32>
    %cst_13 = arith.constant dense<0.000000e+00> : vector<32x32xf32>
    %28 = tpu.matmul %26, %27, %cst_13 {dimension_numbers = #tpu.dot_dimension_numbers<[1], [0], [0], [1], [0, 0, 1, 1], [], []>} : vector<32x48xf32>, vector<48x32xf32>, vector<32x32xf32> -> vector<32x32xf32>
    %c1_14 = arith.constant 1 : index
    %c0_15 = arith.constant 0 : index
    %29 = vector.load %arg7[%c1_14, %c0_15] : memref<3x128xf32, #tpu.memory_space<vmem>>, vector<1x32xf32>
    %30 = vector.broadcast %29 : vector<1x32xf32> to vector<32x32xf32>
    %31 = arith.addf %28, %30 : vector<32x32xf32>
    %cst_16 = arith.constant 0.000000e+00 : f32
    %32 = vector.broadcast %cst_16 : f32 to vector<32x32xf32>
    %33 = arith.maximumf %31, %32 : vector<32x32xf32>
    %c0_17 = arith.constant 0 : index
    %c0_18 = arith.constant 0 : index
    %34 = vector.load %arg3[%c0_17, %c0_18] : memref<2x32xf32, #tpu.memory_space<vmem>>, vector<2x32xf32>
    %cst_19 = arith.constant dense<0.000000e+00> : vector<2x32xf32>
    %35 = tpu.matmul %34, %33, %cst_19 {dimension_numbers = #tpu.dot_dimension_numbers<[1], [0], [0], [1], [0, 0, 1, 1], [], []>} : vector<2x32xf32>, vector<32x32xf32>, vector<2x32xf32> -> vector<2x32xf32>
    %c0_20 = arith.constant 0 : index
    %c0_21 = arith.constant 0 : index
    %36 = vector.load %arg6[%c0_20, %c0_21] : memref<32x128xf32, #tpu.memory_space<vmem>>, vector<32x128xf32>
    %cst_22 = arith.constant dense<0.000000e+00> : vector<2x128xf32>
    %37 = tpu.matmul %35, %36, %cst_22 {dimension_numbers = #tpu.dot_dimension_numbers<[1], [0], [0], [1], [0, 0, 1, 1], [], []>} : vector<2x32xf32>, vector<32x128xf32>, vector<2x128xf32> -> vector<2x128xf32>
    %c2_23 = arith.constant 2 : index
    %c0_24 = arith.constant 0 : index
    %38 = vector.load %arg7[%c2_23, %c0_24] : memref<3x128xf32, #tpu.memory_space<vmem>>, vector<1x128xf32>
    %39 = vector.broadcast %38 : vector<1x128xf32> to vector<2x128xf32>
    %40 = arith.addf %37, %39 : vector<2x128xf32>
    %c0_25 = arith.constant 0 : index
    %c0_26 = arith.constant 0 : index
    %41 = vector.load %arg8[%c0_25, %c0_26] : memref<2x128xf32, #tpu.memory_space<vmem>>, vector<2x128xf32>
    tpu.vector_store %arg8[%c0_25, %c0_26], %40 {strides = array<i32>} : memref<2x128xf32, #tpu.memory_space<vmem>>, vector<2x128xf32>,
    return
  }
  func.func @transform_0(%arg0: i32) -> (i32, i32) {
    %c0_i32 = arith.constant 0 : i32
    %c0_i32_0 = arith.constant 0 : i32
    return %arg0, %c0_i32 : i32, i32
  }
  func.func @transform_1(%arg0: i32) -> (i32, i32) {
    %c0_i32 = arith.constant 0 : i32
    %c0_i32_0 = arith.constant 0 : i32
    %c0_i32_1 = arith.constant 0 : i32
    return %c0_i32, %c0_i32_0 : i32, i32
  }
  func.func @transform_2(%arg0: i32) -> (i32, i32) {
    %c0_i32 = arith.constant 0 : i32
    %c0_i32_0 = arith.constant 0 : i32
    %c0_i32_1 = arith.constant 0 : i32
    return %c0_i32, %c0_i32_0 : i32, i32
  }
  func.func @transform_3(%arg0: i32) -> (i32, i32) {
    %c0_i32 = arith.constant 0 : i32
    %c0_i32_0 = arith.constant 0 : i32
    %c0_i32_1 = arith.constant 0 : i32
    return %c0_i32, %c0_i32_0 : i32, i32
  }
  func.func @transform_4(%arg0: i32) -> (i32, i32) {
    %c0_i32 = arith.constant 0 : i32
    %c0_i32_0 = arith.constant 0 : i32
    %c0_i32_1 = arith.constant 0 : i32
    return %c0_i32, %c0_i32_0 : i32, i32
  }
  func.func @transform_5(%arg0: i32) -> (i32, i32) {
    %c0_i32 = arith.constant 0 : i32
    %c0_i32_0 = arith.constant 0 : i32
    %c0_i32_1 = arith.constant 0 : i32
    return %c0_i32, %c0_i32_0 : i32, i32
  }
  func.func @transform_6(%arg0: i32) -> (i32, i32) {
    %c0_i32 = arith.constant 0 : i32
    %c0_i32_0 = arith.constant 0 : i32
    %c0_i32_1 = arith.constant 0 : i32
    return %c0_i32, %c0_i32_0 : i32, i32
  }
  func.func @transform_7(%arg0: i32) -> (i32, i32) {
    %c0_i32 = arith.constant 0 : i32
    %c0_i32_0 = arith.constant 0 : i32
    return %arg0, %c0_i32 : i32, i32
  }
}

</mosaic_0001>

<llo_original>
// kernel: small_csp_cnn_forward.1
$region0: #{small_csp_cnn_forward.1}
  #allocation0 [shape = 'u32[]', space=smem, size = 0x4, offset = 0x4, fixed_abs, tag = 'smem constant byte address 0x4 - core index']
  #allocation1 [shape = 'u32[144,128]{1,0:T(1,128)}', space=vmem, size = 0x12000, scoped, tag = 'internal scratch']
  %s0 = inlined_call_operand.vmem [shape: f32[32,4], index: 0, kind: input, shape index: {}]
  %s1 = inlined_call_operand.vmem [shape: f32[32,8], index: 1, kind: input, shape index: {}]
  %s2 = inlined_call_operand.vmem [shape: f32[2,32], index: 2, kind: input, shape index: {}]
  %s3 = inlined_call_operand.vmem [shape: f32[12,16], index: 3, kind: input, shape index: {}]
  %s4 = inlined_call_operand.vmem [shape: f32[48,32], index: 4, kind: input, shape index: {}]
  %s5 = inlined_call_operand.vmem [shape: f32[32,128], index: 5, kind: input, shape index: {}]
  %s6 = inlined_call_operand.vmem [shape: f32[3,128], index: 6, kind: input, shape index: {}]
  %s7 = inlined_call_operand.hbm [shape: f32[2,128], index: 7, kind: output, shape index: {}]
  %s8 = sld [smem:[#allocation0]]
  $region38: #{small_csp_cnn_forward.1} parent=0
    _
  %s10 = ssub.s32 1, %s8
  %s11 = scalar_select 0, %s10, %s8
  $region1: #{small_csp_cnn_forward.1} parent=0
    #allocation2 [shape = 'u8[1024]{0}', space=vmem, size = 0x400, scoped, tag = 'output window, operand 0, single buffered']
    #allocation3 [shape = 's32[1]{0}', space=sflag, size = 0x4, scoped, tag = 'scoped memory for small_csp_cnn_forward.1']
    %12 = vsyncpa [#allocation3], 0
    // Predicated region
    $region2: #{small_csp_cnn_forward.1} parent=1 // pred_check
      _
    $region3: #{small_csp_cnn_forward.1} parent=1 // pred_check_branch
      %14 = sbr.rel (0) target = $region5
    $region4: #{small_csp_cnn_forward.1} parent=1 // pred_region
      _
    $region5: #{small_csp_cnn_forward.1} parent=1 // pred_fallthru
      _
    // Predicated region
    $region6: #{small_csp_cnn_forward.1} parent=1 // pred_check
      _
    $region7: #{small_csp_cnn_forward.1} parent=1 // pred_check_branch
      %16 = sbr.rel (0) target = $region9
    $region8: #{small_csp_cnn_forward.1} parent=1 // pred_region
      _
    $region9: #{small_csp_cnn_forward.1} parent=1 // pred_fallthru
      _
    // Predicated region
    $region10: #{small_csp_cnn_forward.1} parent=1 // pred_check
      _
    $region11: #{small_csp_cnn_forward.1} parent=1 // pred_check_branch
      %18 = sbr.rel (0) target = $region13
    $region12: #{small_csp_cnn_forward.1} parent=1 // pred_region
      _
    $region13: #{small_csp_cnn_forward.1} parent=1 // pred_fallthru
      _
    // Predicated region
    $region14: #{small_csp_cnn_forward.1} parent=1 // pred_check
      _
    $region15: #{small_csp_cnn_forward.1} parent=1 // pred_check_branch
      %20 = sbr.rel (0) target = $region17
    $region16: #{small_csp_cnn_forward.1} parent=1 // pred_region
      _
    $region17: #{small_csp_cnn_forward.1} parent=1 // pred_fallthru
      _
    // Predicated region
    $region18: #{small_csp_cnn_forward.1} parent=1 // pred_check
      _
    $region19: #{small_csp_cnn_forward.1} parent=1 // pred_check_branch
      %22 = sbr.rel (0) target = $region21
    $region20: #{small_csp_cnn_forward.1} parent=1 // pred_region
      _
    $region21: #{small_csp_cnn_forward.1} parent=1 // pred_fallthru
      _
    // Predicated region
    $region22: #{small_csp_cnn_forward.1} parent=1 // pred_check
      _
    $region23: #{small_csp_cnn_forward.1} parent=1 // pred_check_branch
      %24 = sbr.rel (0) target = $region25
    $region24: #{small_csp_cnn_forward.1} parent=1 // pred_region
      _
    $region25: #{small_csp_cnn_forward.1} parent=1 // pred_fallthru
      _
    // Predicated region
    $region26: #{small_csp_cnn_forward.1} parent=1 // pred_check
      _
    $region27: #{small_csp_cnn_forward.1} parent=1 // pred_check_branch
      %26 = sbr.rel (0) target = $region29
    $region28: #{small_csp_cnn_forward.1} parent=1 // pred_region
      _
    $region29: #{small_csp_cnn_forward.1} parent=1 // pred_fallthru
      _
    %v27 = vld [vmem:[%s0] sm:$0xff]
    %v28 = vld [vmem:[%s0 + $0x8] sm:$0xff]
    %v29 = vld [vmem:[%s0 + $0x10] sm:$0xff]
    %v30 = vld [vmem:[%s0 + $0x18] sm:$0xff]
    %v31 = vld [vmem:[%s1] sm:$0xff]
    %v32 = vld [vmem:[%s1 + $0x8] sm:$0xff]
    %v33 = vld [vmem:[%s1 + $0x10] sm:$0xff]
    %v34 = vld [vmem:[%s1 + $0x18] sm:$0xff]
    %v35 = vrot.slane %v27, 7
    %v36 = vrot.slane %v28, 7
    %v37 = vrot.slane %v29, 7
    %v38 = vrot.slane %v30, 7
    %v39 = vlaneseq
    %v40 = vshrl.u32 %v39, 7
    %vm41 = vcmp.lt.s32.totalorder %v40, 1
    %v42 = vsel %vm41, %v37, %v38
    %v43 = vsel %vm41, %v36, %v37
    %v44 = vsel %vm41, %v35, %v36
    %v45 = vsel %vm41, %v38, %v35
    %47 = vset.pattern.permute.xlu0 0
    %48 = vperm.xlu0 %47, %v31
    %v49 = vpop.permute.xlu0 %48
    %52 = vset.pattern.permute.xlu0 0
    %53 = vperm.xlu0 %52, %v32
    %v54 = vpop.permute.xlu0 %53
    %57 = vset.pattern.permute.xlu0 0
    %58 = vperm.xlu0 %57, %v33
    %v59 = vpop.permute.xlu0 %58
    %62 = vset.pattern.permute.xlu0 0
    %63 = vperm.xlu0 %62, %v34
    %v64 = vpop.permute.xlu0 %63
    %v66 = vmul.f32 %v45, %v49
    %v67 = vmul.f32 %v44, %v54
    %v68 = vmul.f32 %v43, %v59
    %v69 = vmul.f32 %v42, %v64
    %v70 = vrot.slane %v27, 1
    %v71 = vrot.slane %v28, 1
    %v72 = vrot.slane %v29, 1
    %v73 = vrot.slane %v30, 1
    %vm74 = vcmp.lt.s32.totalorder %v40, 7
    %v75 = vsel %vm74, %v72, %v73
    %v76 = vsel %vm74, %v71, %v72
    %v77 = vsel %vm74, %v70, %v71
    %v78 = vsel %vm74, %v73, %v70
    %79 = vset.pattern.permute.xlu0 1
    %80 = vperm.xlu0 %79, %v31
    %v81 = vpop.permute.xlu0 %80
    %83 = vset.pattern.permute.xlu0 1
    %84 = vperm.xlu0 %83, %v32
    %v85 = vpop.permute.xlu0 %84
    %87 = vset.pattern.permute.xlu0 1
    %88 = vperm.xlu0 %87, %v33
    %v89 = vpop.permute.xlu0 %88
    %91 = vset.pattern.permute.xlu0 1
    %92 = vperm.xlu0 %91, %v34
    %v93 = vpop.permute.xlu0 %92
    %v95 = vmul.f32 %v77, %v81
    %v96 = vmul.f32 %v76, %v85
    %v97 = vmul.f32 %v75, %v89
    %v98 = vmul.f32 %v78, %v93
    %103 = vrot.lane.b32.xlu0 %v27, 4
    %v104 = vpop.permute.xlu0 %103
    %105 = vrot.lane.b32.xlu0 %v28, 4
    %v106 = vpop.permute.xlu0 %105
    %107 = vrot.lane.b32.xlu0 %v29, 4
    %v108 = vpop.permute.xlu0 %107
    %109 = vrot.lane.b32.xlu0 %v30, 4
    %v110 = vpop.permute.xlu0 %109
    %119 = vrot.lane.b32.xlu0 %v95, 8
    %v120 = vpop.permute.xlu0 %119
    %121 = vrot.lane.b32.xlu0 %v96, 8
    %v122 = vpop.permute.xlu0 %121
    %123 = vrot.lane.b32.xlu0 %v97, 8
    %v124 = vpop.permute.xlu0 %123
    %125 = vrot.lane.b32.xlu0 %v98, 8
    %v126 = vpop.permute.xlu0 %125
    %vm131 = vcmask 31744
    %v132 = vsel %vm131, %v66, %v104
    %v133 = vsel %vm131, %v67, %v106
    %v134 = vsel %vm131, %v68, %v108
    %v135 = vsel %vm131, %v69, %v110
    %vm136 = vcmask 64512
    %v137 = vsel %vm136, %v132, %v120
    %v138 = vsel %vm136, %v133, %v122
    %v139 = vsel %vm136, %v134, %v124
    %v140 = vsel %vm136, %v135, %v126
    %v141 = vld [vmem:[%s3] sm:$0xff]
    %v142 = vld [vmem:[%s3 + $0x8] sm:$0xf]
    %v143 = vld [vmem:[%s6] sm:$0x1]
    %v144 = vlaneseq
    %v145 = vshrl.u32 %v144, 7
    %v146 = vsub.s32 0, %v145
    %v147 = vrot.slane %v143, %v146
    %vm148 = vcmask 97280
    %v150 = vsel %vm148, %v137, 0
    %v153 = vsel %vm148, %v138, 0
    %v156 = vsel %vm148, %v139, 0
    %v159 = vsel %vm148, %v140, 0
    %vm161 = vcmask 1043456
    %v163 = vsel %vm161, %v142, 0
    %165 = vmatprep.subr.mxu0 0.0
    %166 = vmatpush1.msra.mxu0 %v141
    %167 = vmatprep.subr.mxu0 0.0
    %168 = vmatpush1.msra.mxu0 %v163
    %169 = vmatprep.subr.mxu0 0.0
    %170 = vmatpush1.msra.mxu0 0.0
    %171 = vmatprep.subr.mxu0 0.0
    %172 = vmatpush1.msra.mxu0 0.0
    %173 = vmatprep.subr.mxu0 0.0
    %174 = vmatpush1.msra.mxu0 0.0
    %175 = vmatprep.subr.mxu0 0.0
    %176 = vmatpush1.msra.mxu0 0.0
    %177 = vmatprep.subr.mxu0 0.0
    %178 = vmatpush1.msra.mxu0 0.0
    %179 = vmatprep.subr.mxu0 0.0
    %180 = vmatpush1.msra.mxu0 0.0
    %181 = vmatprep.subr.mxu0 0.0
    %182 = vmatpush1.msra.mxu0 0.0
    %183 = vmatprep.subr.mxu0 0.0
    %184 = vmatpush1.msra.mxu0 0.0
    %185 = vmatprep.subr.mxu0 0.0
    %186 = vmatpush1.msra.mxu0 0.0
    %187 = vmatprep.subr.mxu0 0.0
    %188 = vmatpush1.msra.mxu0 0.0
    %189 = vmatprep.subr.mxu0 0.0
    %190 = vmatpush1.msra.mxu0 0.0
    %191 = vmatprep.subr.mxu0 0.0
    %192 = vmatpush1.msra.mxu0 0.0
    %193 = vmatprep.subr.mxu0 0.0
    %194 = vmatpush1.msra.mxu0 0.0
    %195 = vmatprep.subr.mxu0 0.0
    %196 = vmatpush1.msra.mxu0 0.0
    %197 = vmatprep.subr.mxu0 0.0
    %198 = vmatpush1.msra.mxu0 0.0
    %199 = vmatprep.subr.mxu0 0.0
    %200 = vmatpush1.msra.mxu0 0.0
    %201 = vmatprep.subr.mxu0 0.0
    %202 = vmatpush1.msra.mxu0 0.0
    %203 = vmatprep.subr.mxu0 0.0
    %204 = vmatpush1.msra.mxu0 0.0
    %205 = vmatprep.subr.mxu0 0.0
    %206 = vmatpush1.msra.mxu0 0.0
    %207 = vmatprep.subr.mxu0 0.0
    %208 = vmatpush1.msra.mxu0 0.0
    %209 = vmatprep.subr.mxu0 0.0
    %210 = vmatpush1.msra.mxu0 0.0
    %211 = vmatprep.subr.mxu0 0.0
    %212 = vmatpush1.msra.mxu0 0.0
    %213 = vmatprep.subr.mxu0 0.0
    %214 = vmatpush1.msra.mxu0 0.0
    %215 = vmatprep.subr.mxu0 0.0
    %216 = vmatpush1.msra.mxu0 0.0
    %217 = vmatprep.subr.mxu0 0.0
    %218 = vmatpush1.msra.mxu0 0.0
    %219 = vmatprep.subr.mxu0 0.0
    %220 = vmatpush1.msra.mxu0 0.0
    %221 = vmatprep.subr.mxu0 0.0
    %222 = vmatpush1.msra.mxu0 0.0
    %223 = vmatprep.subr.mxu0 0.0
    %224 = vmatpush1.msra.mxu0 0.0
    %225 = vmatprep.subr.mxu0 0.0
    %226 = vmatpush1.msra.mxu0 0.0
    %227 = vmatprep.subr.mxu0 0.0
    %228 = vmatpush1.msra.mxu0 0.0
    %229 = vmatprep.mubr.f32.mxu0 0.0
    %230 = vmatmul.mubr.f32.gmra.mrb[0].mxu0 %v150
    %v231 = vpop.f32.mrb[0].mxu0
    %v232 = vadd.f32 %v147, %v231
    %v233 = vpop.f32.mrb[0].mxu0
    %234 = vmatprep.mubr.f32.mxu0 0.0
    %235 = vmatmul.mubr.f32.gmra.mrb[0].mxu0 %v153
    %v236 = vpop.f32.mrb[0].mxu0
    %v237 = vadd.f32 %v147, %v236
    %v238 = vpop.f32.mrb[0].mxu0
    %239 = vmatprep.mubr.f32.mxu0 0.0
    %240 = vmatmul.mubr.f32.gmra.mrb[0].mxu0 %v156
    %v241 = vpop.f32.mrb[0].mxu0
    %v242 = vadd.f32 %v147, %v241
    %v243 = vpop.f32.mrb[0].mxu0
    %244 = vmatprep.mubr.f32.mxu0 0.0
    %245 = vmatmul.mubr.f32.gmra.mrb[0].mxu0 %v159
    %v246 = vpop.f32.mrb[0].mxu0
    %v247 = vadd.f32 %v147, %v246
    %v248 = vpop.f32.mrb[0].mxu0
    %249 = vdwg.mxu0
    %v250 = vmax.f32 %v232, 0.0
    %v251 = vmax.f32 %v237, 0.0
    %v252 = vmax.f32 %v242, 0.0
    %v253 = vmax.f32 %v247, 0.0
    %v254 = vrot.slane %v250, 1
    %v255 = vrot.slane %v251, 1
    %v256 = vrot.slane %v252, 1
    %v257 = vrot.slane %v253, 1
    %v258 = vsel %vm74, %v256, %v257
    %v259 = vsel %vm74, %v255, %v256
    %v260 = vsel %vm74, %v254, %v255
    %v261 = vsel %vm74, %v257, %v254
    %v262 = vmax.f32 %v250, %v260
    %v263 = vmax.f32 %v251, %v259
    %v264 = vmax.f32 %v252, %v258
    %v265 = vmax.f32 %v253, %v261
    %v266 = vrot.slane %v262, 6
    %v267 = vrot.slane %v263, 6
    %v268 = vrot.slane %v264, 6
    %v269 = vrot.slane %v265, 6
    %vm270 = vcmp.lt.s32.totalorder %v40, 2
    %v271 = vsel %vm270, %v268, %v269
    %v272 = vsel %vm270, %v267, %v268
    %v273 = vsel %vm270, %v266, %v267
    %v274 = vsel %vm270, %v269, %v266
    %v275 = vmul.f32 %v274, %v49
    %v276 = vmul.f32 %v273, %v54
    %v277 = vmul.f32 %v272, %v59
    %v278 = vmul.f32 %v271, %v64
    %v279 = vrot.slane %v262, 2
    %v280 = vrot.slane %v263, 2
    %v281 = vrot.slane %v264, 2
    %v282 = vrot.slane %v265, 2
    %vm283 = vcmp.lt.s32.totalorder %v40, 6
    %v284 = vsel %vm283, %v281, %v282
    %v285 = vsel %vm283, %v280, %v281
    %v286 = vsel %vm283, %v279, %v280
    %v287 = vsel %vm283, %v282, %v279
    %288 = vset.pattern.permute.xlu0 2
    %289 = vperm.xlu0 %288, %v31
    %v290 = vpop.permute.xlu0 %289
    %292 = vset.pattern.permute.xlu0 2
    %293 = vperm.xlu0 %292, %v32
    %v294 = vpop.permute.xlu0 %293
    %296 = vset.pattern.permute.xlu0 2
    %297 = vperm.xlu0 %296, %v33
    %v298 = vpop.permute.xlu0 %297
    %300 = vset.pattern.permute.xlu0 2
    %301 = vperm.xlu0 %300, %v34
    %v302 = vpop.permute.xlu0 %301
    %v304 = vmul.f32 %v286, %v290
    %v305 = vmul.f32 %v285, %v294
    %v306 = vmul.f32 %v284, %v298
    %v307 = vmul.f32 %v287, %v302
    %312 = vrot.lane.b32.xlu0 %v262, 16
    %v313 = vpop.permute.xlu0 %312
    %314 = vrot.lane.b32.xlu0 %v263, 16
    %v315 = vpop.permute.xlu0 %314
    %316 = vrot.lane.b32.xlu0 %v264, 16
    %v317 = vpop.permute.xlu0 %316
    %318 = vrot.lane.b32.xlu0 %v265, 16
    %v319 = vpop.permute.xlu0 %318
    %328 = vrot.lane.b32.xlu0 %v304, 32
    %v329 = vpop.permute.xlu0 %328
    %330 = vrot.lane.b32.xlu0 %v305, 32
    %v331 = vpop.permute.xlu0 %330
    %332 = vrot.lane.b32.xlu0 %v306, 32
    %v333 = vpop.permute.xlu0 %332
    %334 = vrot.lane.b32.xlu0 %v307, 32
    %v335 = vpop.permute.xlu0 %334
    %vm340 = vcmask 130048
    %v341 = vsel %vm340, %v275, %v313
    %v342 = vsel %vm340, %v276, %v315
    %v343 = vsel %vm340, %v277, %v317
    %v344 = vsel %vm340, %v278, %v319
    %vm345 = vcmask 261120
    %v346 = vsel %vm345, %v341, %v329
    %v347 = vsel %vm345, %v342, %v331
    %v348 = vsel %vm345, %v343, %v333
    %v349 = vsel %vm345, %v344, %v335
    %v350 = vld [vmem:[%s4] sm:$0xff]
    %v351 = vld [vmem:[%s4 + $0x8] sm:$0xff]
    %v352 = vld [vmem:[%s4 + $0x10] sm:$0xff]
    %v353 = vld [vmem:[%s4 + $0x18] sm:$0xff]
    %v354 = vld [vmem:[%s4 + $0x20] sm:$0xff]
    %v355 = vld [vmem:[%s4 + $0x28] sm:$0xff]
    %v356 = vld [vmem:[%s6 + $0x1] sm:$0x1]
    %v357 = vlaneseq
    %v358 = vshrl.u32 %v357, 7
    %v359 = vsub.s32 0, %v358
    %v360 = vrot.slane %v356, %v359
    %vm361 = vcmask 392192
    %v363 = vsel %vm361, %v346, 0
    %v366 = vsel %vm361, %v347, 0
    %v369 = vsel %vm361, %v348, 0
    %v372 = vsel %vm361, %v349, 0
    %374 = vmatprep.subr.mxu0 0.0
    %375 = vmatpush1.msra.mxu0 %v350
    %376 = vmatprep.subr.mxu0 0.0
    %377 = vmatpush1.msra.mxu0 %v351
    %378 = vmatprep.subr.mxu0 0.0
    %379 = vmatpush1.msra.mxu0 %v352
    %380 = vmatprep.subr.mxu0 0.0
    %381 = vmatpush1.msra.mxu0 %v353
    %382 = vmatprep.subr.mxu0 0.0
    %383 = vmatpush1.msra.mxu0 %v354
    %384 = vmatprep.subr.mxu0 0.0
    %385 = vmatpush1.msra.mxu0 %v355
    %386 = vmatprep.subr.mxu0 0.0
    %387 = vmatpush1.msra.mxu0 0.0
    %388 = vmatprep.subr.mxu0 0.0
    %389 = vmatpush1.msra.mxu0 0.0
    %390 = vmatprep.subr.mxu0 0.0
    %391 = vmatpush1.msra.mxu0 0.0
    %392 = vmatprep.subr.mxu0 0.0
    %393 = vmatpush1.msra.mxu0 0.0
    %394 = vmatprep.subr.mxu0 0.0
    %395 = vmatpush1.msra.mxu0 0.0
    %396 = vmatprep.subr.mxu0 0.0
    %397 = vmatpush1.msra.mxu0 0.0
    %398 = vmatprep.subr.mxu0 0.0
    %399 = vmatpush1.msra.mxu0 0.0
    %400 = vmatprep.subr.mxu0 0.0
    %401 = vmatpush1.msra.mxu0 0.0
    %402 = vmatprep.subr.mxu0 0.0
    %403 = vmatpush1.msra.mxu0 0.0
    %404 = vmatprep.subr.mxu0 0.0
    %405 = vmatpush1.msra.mxu0 0.0
    %406 = vmatprep.subr.mxu0 0.0
    %407 = vmatpush1.msra.mxu0 0.0
    %408 = vmatprep.subr.mxu0 0.0
    %409 = vmatpush1.msra.mxu0 0.0
    %410 = vmatprep.subr.mxu0 0.0
    %411 = vmatpush1.msra.mxu0 0.0
    %412 = vmatprep.subr.mxu0 0.0
    %413 = vmatpush1.msra.mxu0 0.0
    %414 = vmatprep.subr.mxu0 0.0
    %415 = vmatpush1.msra.mxu0 0.0
    %416 = vmatprep.subr.mxu0 0.0
    %417 = vmatpush1.msra.mxu0 0.0
    %418 = vmatprep.subr.mxu0 0.0
    %419 = vmatpush1.msra.mxu0 0.0
    %420 = vmatprep.subr.mxu0 0.0
    %421 = vmatpush1.msra.mxu0 0.0
    %422 = vmatprep.subr.mxu0 0.0
    %423 = vmatpush1.msra.mxu0 0.0
    %424 = vmatprep.subr.mxu0 0.0
    %425 = vmatpush1.msra.mxu0 0.0
    %426 = vmatprep.subr.mxu0 0.0
    %427 = vmatpush1.msra.mxu0 0.0
    %428 = vmatprep.subr.mxu0 0.0
    %429 = vmatpush1.msra.mxu0 0.0
    %430 = vmatprep.subr.mxu0 0.0
    %431 = vmatpush1.msra.mxu0 0.0
    %432 = vmatprep.subr.mxu0 0.0
    %433 = vmatpush1.msra.mxu0 0.0
    %434 = vmatprep.subr.mxu0 0.0
    %435 = vmatpush1.msra.mxu0 0.0
    %436 = vmatprep.subr.mxu0 0.0
    %437 = vmatpush1.msra.mxu0 0.0
    %438 = vmatprep.mubr.f32.mxu0 0.0
    %439 = vmatmul.mubr.f32.gmra.mrb[0].mxu0 %v363
    %v440 = vpop.f32.mrb[0].mxu0
    %v441 = vadd.f32 %v360, %v440
    %v442 = vpop.f32.mrb[0].mxu0
    %443 = vmatprep.mubr.f32.mxu0 0.0
    %444 = vmatmul.mubr.f32.gmra.mrb[0].mxu0 %v366
    %v445 = vpop.f32.mrb[0].mxu0
    %v446 = vadd.f32 %v360, %v445
    %v447 = vpop.f32.mrb[0].mxu0
    %448 = vmatprep.mubr.f32.mxu0 0.0
    %449 = vmatmul.mubr.f32.gmra.mrb[0].mxu0 %v369
    %v450 = vpop.f32.mrb[0].mxu0
    %v451 = vadd.f32 %v360, %v450
    %v452 = vpop.f32.mrb[0].mxu0
    %453 = vmatprep.mubr.f32.mxu0 0.0
    %454 = vmatmul.mubr.f32.gmra.mrb[0].mxu0 %v372
    %v455 = vpop.f32.mrb[0].mxu0
    %v456 = vadd.f32 %v360, %v455
    %v457 = vpop.f32.mrb[0].mxu0
    %458 = vdwg.mxu0
    %v459 = vmax.f32 %v441, 0.0
    %v460 = vmax.f32 %v446, 0.0
    %v461 = vmax.f32 %v451, 0.0
    %v462 = vmax.f32 %v456, 0.0
    %v463 = vld [vmem:[%s2] sm:$0x3]
    %v465 = vsel %vm345, %v463, 0
    %467 = vmatprep.subr.mxu0 0.0
    %468 = vmatpush1.msra.mxu0 %v459
    %469 = vmatprep.subr.mxu0 0.0
    %470 = vmatpush1.msra.mxu0 %v460
    %471 = vmatprep.subr.mxu0 0.0
    %472 = vmatpush1.msra.mxu0 %v461
    %473 = vmatprep.subr.mxu0 0.0
    %474 = vmatpush1.msra.mxu0 %v462
    %475 = vmatprep.subr.mxu0 0.0
    %476 = vmatpush1.msra.mxu0 0.0
    %477 = vmatprep.subr.mxu0 0.0
    %478 = vmatpush1.msra.mxu0 0.0
    %479 = vmatprep.subr.mxu0 0.0
    %480 = vmatpush1.msra.mxu0 0.0
    %481 = vmatprep.subr.mxu0 0.0
    %482 = vmatpush1.msra.mxu0 0.0
    %483 = vmatprep.subr.mxu0 0.0
    %484 = vmatpush1.msra.mxu0 0.0
    %485 = vmatprep.subr.mxu0 0.0
    %486 = vmatpush1.msra.mxu0 0.0
    %487 = vmatprep.subr.mxu0 0.0
    %488 = vmatpush1.msra.mxu0 0.0
    %489 = vmatprep.subr.mxu0 0.0
    %490 = vmatpush1.msra.mxu0 0.0
    %491 = vmatprep.subr.mxu0 0.0
    %492 = vmatpush1.msra.mxu0 0.0
    %493 = vmatprep.subr.mxu0 0.0
    %494 = vmatpush1.msra.mxu0 0.0
    %495 = vmatprep.subr.mxu0 0.0
    %496 = vmatpush1.msra.mxu0 0.0
    %497 = vmatprep.subr.mxu0 0.0
    %498 = vmatpush1.msra.mxu0 0.0
    %499 = vmatprep.subr.mxu0 0.0
    %500 = vmatpush1.msra.mxu0 0.0
    %501 = vmatprep.subr.mxu0 0.0
    %502 = vmatpush1.msra.mxu0 0.0
    %503 = vmatprep.subr.mxu0 0.0
    %504 = vmatpush1.msra.mxu0 0.0
    %505 = vmatprep.subr.mxu0 0.0
    %506 = vmatpush1.msra.mxu0 0.0
    %507 = vmatprep.subr.mxu0 0.0
    %508 = vmatpush1.msra.mxu0 0.0
    %509 = vmatprep.subr.mxu0 0.0
    %510 = vmatpush1.msra.mxu0 0.0
    %511 = vmatprep.subr.mxu0 0.0
    %512 = vmatpush1.msra.mxu0 0.0
    %513 = vmatprep.subr.mxu0 0.0
    %514 = vmatpush1.msra.mxu0 0.0
    %515 = vmatprep.subr.mxu0 0.0
    %516 = vmatpush1.msra.mxu0 0.0
    %517 = vmatprep.subr.mxu0 0.0
    %518 = vmatpush1.msra.mxu0 0.0
    %519 = vmatprep.subr.mxu0 0.0
    %520 = vmatpush1.msra.mxu0 0.0
    %521 = vmatprep.subr.mxu0 0.0
    %522 = vmatpush1.msra.mxu0 0.0
    %523 = vmatprep.subr.mxu0 0.0
    %524 = vmatpush1.msra.mxu0 0.0
    %525 = vmatprep.subr.mxu0 0.0
    %526 = vmatpush1.msra.mxu0 0.0
    %527 = vmatprep.subr.mxu0 0.0
    %528 = vmatpush1.msra.mxu0 0.0
    %529 = vmatprep.subr.mxu0 0.0
    %530 = vmatpush1.msra.mxu0 0.0
    %531 = vmatprep.mubr.f32.mxu0 0.0
    %532 = vmatmul.mubr.f32.gmra.mrb[0].mxu0 %v465
    %v533 = vpop.f32.mrb[0].mxu0
    %v534 = vadd.f32 0.0, %v533
    %v535 = vpop.f32.mrb[0].mxu0
    %536 = vdwg.mxu0
    %v537 = vld [vmem:[%s5] sm:$0xff]
    %v538 = vld [vmem:[%s5 + $0x8] sm:$0xff]
    %v539 = vld [vmem:[%s5 + $0x10] sm:$0xff]
    %v540 = vld [vmem:[%s5 + $0x18] sm:$0xff]
    %v541 = vld [vmem:[%s6 + $0x2] sm:$0x1]
    %v542 = vlaneseq
    %v543 = vshrl.u32 %v542, 7
    %v544 = vsub.s32 0, %v543
    %v545 = vrot.slane %v541, %v544
    %v547 = vsel %vm345, %v534, 0
    %549 = vmatprep.subr.mxu0 0.0
    %550 = vmatpush1.msra.mxu0 %v537
    %551 = vmatprep.subr.mxu0 0.0
    %552 = vmatpush1.msra.mxu0 %v538
    %553 = vmatprep.subr.mxu0 0.0
    %554 = vmatpush1.msra.mxu0 %v539
    %555 = vmatprep.subr.mxu0 0.0
    %556 = vmatpush1.msra.mxu0 %v540
    %557 = vmatprep.subr.mxu0 0.0
    %558 = vmatpush1.msra.mxu0 0.0
    %559 = vmatprep.subr.mxu0 0.0
    %560 = vmatpush1.msra.mxu0 0.0
    %561 = vmatprep.subr.mxu0 0.0
    %562 = vmatpush1.msra.mxu0 0.0
    %563 = vmatprep.subr.mxu0 0.0
    %564 = vmatpush1.msra.mxu0 0.0
    %565 = vmatprep.subr.mxu0 0.0
    %566 = vmatpush1.msra.mxu0 0.0
    %567 = vmatprep.subr.mxu0 0.0
    %568 = vmatpush1.msra.mxu0 0.0
    %569 = vmatprep.subr.mxu0 0.0
    %570 = vmatpush1.msra.mxu0 0.0
    %571 = vmatprep.subr.mxu0 0.0
    %572 = vmatpush1.msra.mxu0 0.0
    %573 = vmatprep.subr.mxu0 0.0
    %574 = vmatpush1.msra.mxu0 0.0
    %575 = vmatprep.subr.mxu0 0.0
    %576 = vmatpush1.msra.mxu0 0.0
    %577 = vmatprep.subr.mxu0 0.0
    %578 = vmatpush1.msra.mxu0 0.0
    %579 = vmatprep.subr.mxu0 0.0
    %580 = vmatpush1.msra.mxu0 0.0
    %581 = vmatprep.subr.mxu0 0.0
    %582 = vmatpush1.msra.mxu0 0.0
    %583 = vmatprep.subr.mxu0 0.0
    %584 = vmatpush1.msra.mxu0 0.0
    %585 = vmatprep.subr.mxu0 0.0
    %586 = vmatpush1.msra.mxu0 0.0
    %587 = vmatprep.subr.mxu0 0.0
    %588 = vmatpush1.msra.mxu0 0.0
    %589 = vmatprep.subr.mxu0 0.0
    %590 = vmatpush1.msra.mxu0 0.0
    %591 = vmatprep.subr.mxu0 0.0
    %592 = vmatpush1.msra.mxu0 0.0
    %593 = vmatprep.subr.mxu0 0.0
    %594 = vmatpush1.msra.mxu0 0.0
    %595 = vmatprep.subr.mxu0 0.0
    %596 = vmatpush1.msra.mxu0 0.0
    %597 = vmatprep.subr.mxu0 0.0
    %598 = vmatpush1.msra.mxu0 0.0
    %599 = vmatprep.subr.mxu0 0.0
    %600 = vmatpush1.msra.mxu0 0.0
    %601 = vmatprep.subr.mxu0 0.0
    %602 = vmatpush1.msra.mxu0 0.0
    %603 = vmatprep.subr.mxu0 0.0
    %604 = vmatpush1.msra.mxu0 0.0
    %605 = vmatprep.subr.mxu0 0.0
    %606 = vmatpush1.msra.mxu0 0.0
    %607 = vmatprep.subr.mxu0 0.0
    %608 = vmatpush1.msra.mxu0 0.0
    %609 = vmatprep.subr.mxu0 0.0
    %610 = vmatpush1.msra.mxu0 0.0
    %611 = vmatprep.subr.mxu0 0.0
    %612 = vmatpush1.msra.mxu0 0.0
    %613 = vmatprep.mubr.f32.mxu0 0.0
    %614 = vmatmul.mubr.f32.gmra.mrb[0].mxu0 %v547
    %v615 = vpop.f32.mrb[0].mxu0
    %v616 = vadd.f32 %v545, %v615
    %v617 = vpop.f32.mrb[0].mxu0
    %618 = vdwg.mxu0
    %619 = vst [vmem:[#allocation2] sm:$0x3] %v616
    // Predicated region
    $region30: #{small_csp_cnn_forward.1} parent=1 // pred_check
      _
    $region31: #{small_csp_cnn_forward.1} parent=1 // pred_check_branch
      %621 = sbr.rel (0) target = $region33
    $region32: #{small_csp_cnn_forward.1} parent=1 // pred_region
      %s623 = ssub.s32 32, 32
      %624 = vsyncadd [#allocation3], %s623
      %s626 = sshll.u32 [#allocation2], 4
      %s627 = int_to_ptr.vmem [resolvable:$true] %s626
      %629 = dma.vmem_to_hbm [thread:$0]  %s627, 32, %s7, [#allocation3]
    $region33: #{small_csp_cnn_forward.1} parent=1 // pred_fallthru
      _
    // Predicated region
    $region34: #{small_csp_cnn_forward.1} parent=1 // pred_check
      _
    $region35: #{small_csp_cnn_forward.1} parent=1 // pred_check_branch
      %631 = sbr.rel (0) target = $region37
    $region36: #{small_csp_cnn_forward.1} parent=1 // pred_region
      %632 = dma.done [#allocation3], 32
    $region37: #{small_csp_cnn_forward.1} parent=1 // pred_fallthru
      _
    %633 = vsyncpa [#allocation3], 1

</llo_original>
